<compile_context>
chip_gen: v7x
topology: tpu7x:2x2x1
jax: 0.10.0
libtpu: 0.0.40
codegen_flags: <defaults>
</compile_context>

<pallas_src>
import functools
import math

import jax
import jax.numpy as jnp
from jax import lax
from jax.experimental import pallas as pl
from jax.experimental.pallas import tpu as pltpu


ACT_DTYPE = jnp.bfloat16     # MXU matmul inputs / activation storage
# MXU-friendly tile targets (good on v6e/v7x 256-wide MXU; harmless on v5e).
TILE_M = 512
TILE_N = 256
TILE_K = 512


def _round_up(x, m):
    return (x + m - 1) // m * m


def _pick_tile(dim, target, floor=128):
    """Largest tile <= target that divides dim, descending by /2 but never
    below `floor` (avoids degenerate 8-wide MXU tiles).  If nothing divides,
    fall back to the full dim -- model dims here are <= 4*d_model, so a
    full-dim block is at most a few MiB."""
    if dim <= target:
        return dim
    t = target
    while t >= floor:
        if dim % t == 0:
            return t
        t //= 2
    return dim


def _pad_rows(x, rows):
    if x.shape[0] == rows:
        return x
    return jnp.pad(x, ((0, rows - x.shape[0]), (0, 0)))


def _maybe_buffered_spec(block_shape, index_map, depth=3):
    """Weight-streaming BlockSpec with deeper pipelining (review sweep knob);
    falls back to a plain BlockSpec if this JAX build lacks pipeline_mode."""
    try:
        return pl.BlockSpec(block_shape, index_map,
                            pipeline_mode=pl.Buffered(depth))
    except (TypeError, AttributeError):
        return pl.BlockSpec(block_shape, index_map)


# ----------------------------- Pallas kernels -----------------------------

def _linear_kernel(x_ref, w_ref, b_ref, o_ref, acc_ref, *, activation):
    @pl.when(pl.program_id(2) == 0)
    def _():
        acc_ref[...] = jnp.zeros_like(acc_ref)

    acc_ref[...] += jnp.dot(x_ref[...], w_ref[...],
                            preferred_element_type=jnp.float32)

    @pl.when(pl.program_id(2) == pl.num_programs(2) - 1)
    def _():
        y = acc_ref[...] + b_ref[...]
        if activation == "relu":
            y = jnp.maximum(y, 0.0)
        o_ref[...] = y.astype(o_ref.dtype)


def pallas_linear(x, w, b, activation=None):
    """(M, K) @ (K, N) + (1, N) [-> ReLU]; bf16 inputs, f32 accumulation.
    M is padded to a sublane/tile multiple (never full-dim / 8-row tiles).
    VMEM budget @ tm=512, tn=256, tk=512 (bf16, double-buffered) ~2.5 MiB,
    well under the default scoped VMEM on v5e/v6e/v7x."""
    M, K = x.shape
    N = w.shape[1]
    tm = min(TILE_M, _round_up(M, 8))
    Mp = _round_up(M, tm)
    tn = _pick_tile(N, TILE_N)
    tk = _pick_tile(K, TILE_K)
    xp = _pad_rows(x, Mp)
    out = pl.pallas_call(
        functools.partial(_linear_kernel, activation=activation),
        out_shape=jax.ShapeDtypeStruct((Mp, N), ACT_DTYPE),
        grid=(Mp // tm, N // tn, K // tk),
        in_specs=[
            pl.BlockSpec((tm, tk), lambda i, j, k: (i, k)),
            pl.BlockSpec((tk, tn), lambda i, j, k: (k, j)),
            pl.BlockSpec((1, tn), lambda i, j, k: (0, j)),
        ],
        out_specs=pl.BlockSpec((tm, tn), lambda i, j, k: (i, j)),
        scratch_shapes=[pltpu.VMEM((tm, tn), jnp.float32)],
        compiler_params=pltpu.CompilerParams(
            dimension_semantics=("parallel", "parallel", "arbitrary")),
    )(xp, w, b)
    return out if Mp == M else out[:M]


def _linear_add_norm_kernel(x_ref, w_ref, b_ref, res_ref, g_ref, bn_ref,
                            o_ref, acc_ref, *, eps):
    @pl.when(pl.program_id(1) == 0)
    def _():
        acc_ref[...] = jnp.zeros_like(acc_ref)

    acc_ref[...] += jnp.dot(x_ref[...], w_ref[...],
                            preferred_element_type=jnp.float32)

    @pl.when(pl.program_id(1) == pl.num_programs(1) - 1)
    def _():
        # Fused epilogue: bias + residual add + LayerNorm (all f32).
        s = acc_ref[...] + b_ref[...] + res_ref[...].astype(jnp.float32)
        mean = jnp.mean(s, axis=-1, keepdims=True)
        c = s - mean
        var = jnp.mean(c * c, axis=-1, keepdims=True)
        y = (c * lax.rsqrt(var + eps)) * g_ref[...] + bn_ref[...]
        o_ref[...] = y.astype(o_ref.dtype)


def pallas_linear_add_norm(x, w, b, residual, gamma, beta, eps=1e-5):
    """LayerNorm(residual + (x @ w + b)); the output tile spans full N
    (= d_model) so the LayerNorm reduction stays inside the tile.
    VMEM budget @ tm=512, N=768, tk=512 (FF2 path) ~8-9 MiB incl. residual +
    triple-buffered weight stream -> fits v7x's 32 MiB default scoped VMEM."""
    # NOTE: PyTorch nn.LayerNorm default eps is 1e-5 (HF BERT uses 1e-12).
    M, K = x.shape
    N = w.shape[1]
    tm = min(TILE_M, _round_up(M, 8))
    Mp = _round_up(M, tm)
    tk = _pick_tile(K, TILE_K)
    xp = _pad_rows(x, Mp)
    rp = _pad_rows(residual, Mp)
    out = pl.pallas_call(
        functools.partial(_linear_add_norm_kernel, eps=eps),
        out_shape=jax.ShapeDtypeStruct((Mp, N), ACT_DTYPE),
        grid=(Mp // tm, K // tk),
        in_specs=[
            pl.BlockSpec((tm, tk), lambda i, k: (i, k)),
            _maybe_buffered_spec((tk, N), lambda i, k: (k, 0)),   # weight stream
            pl.BlockSpec((1, N), lambda i, k: (0, 0)),
            pl.BlockSpec((tm, N), lambda i, k: (i, 0)),
            pl.BlockSpec((1, N), lambda i, k: (0, 0)),
            pl.BlockSpec((1, N), lambda i, k: (0, 0)),
        ],
        out_specs=pl.BlockSpec((tm, N), lambda i, k: (i, 0)),
        scratch_shapes=[pltpu.VMEM((tm, N), jnp.float32)],
        compiler_params=pltpu.CompilerParams(
            dimension_semantics=("parallel", "arbitrary")),
    )(xp, w, b, rp, gamma, beta)
    return out if Mp == M else out[:M]


def _mha_kernel(qkv_ref, amask_ref, o_ref, *score_refs):
    """One (batch, head) program: full-softmax attention for a single head.
    qkv_ref: (1, 1, 3, S, Dh) bf16 (Q pre-scaled by 1/sqrt(Dh));
    amask_ref: (1, 1, S) f32 additive mask (0 / -1e9) over key positions."""
    q = qkv_ref[0, 0, 0]                               # (S, Dh)
    k = qkv_ref[0, 0, 1]                               # (S, Dh)
    v = qkv_ref[0, 0, 2]                               # (S, Dh)
    amask = amask_ref[0]                               # (1, S) -- added once

    # Q @ K^T contracting last axes (no explicit transpose), f32 accumulation.
    s = lax.dot_general(q, k, (((1,), (1,)), ((), ())),
                        preferred_element_type=jnp.float32)          # (S, S)
    s = s + amask
    s = s - jnp.max(s, axis=-1, keepdims=True)
    e = jnp.exp(s)
    # Deferred normalization: scale the (S, Dh) PV result, not the (S, S)
    # probabilities; the reciprocal runs on the EUP (free bundle slot).
    inv = pl.reciprocal(jnp.sum(e, axis=-1, keepdims=True), approx=True)
    pv = jnp.dot(e.astype(v.dtype), v, preferred_element_type=jnp.float32)
    o_ref[0, 0] = (pv * inv).astype(o_ref.dtype)
    if score_refs:                                     # final layer only
        score_refs[0][0, 0] = e * inv


def pallas_attention(qkv2d, add_mask, batch, seq, num_heads,
                     return_scores=False):
    """qkv2d: (B*S, 3*D) fused projections (scale folded into Q);
    add_mask: (B, 1, S) additive mask.  Returns a lane-dense (B*S, D) output
    and, only when requested (final layer), the (B, H, S, S) softmax scores."""
    threeD = qkv2d.shape[1]
    D = threeD // 3
    Dh = D // num_heads
    # Head-major layout so every block keeps full (S, Dh)/(S, S) minor dims
    # (static, alignment-friendly blocks); the transpose is JAX-side glue.
    qkv_h = qkv2d.reshape(batch, seq, 3, num_heads, Dh).transpose(0, 3, 2, 1, 4)

    in_specs = [
        pl.BlockSpec((1, 1, 3, seq, Dh), lambda b, h: (b, h, 0, 0, 0)),
        pl.BlockSpec((1, 1, seq), lambda b, h: (b, 0, 0)),
    ]
    out_spec_o = pl.BlockSpec((1, 1, seq, Dh), lambda b, h: (b, h, 0, 0))
    if return_scores:
        out_specs = [out_spec_o,
                     pl.BlockSpec((1, 1, seq, seq), lambda b, h: (b, h, 0, 0))]
        out_shape = [jax.ShapeDtypeStruct((batch, num_heads, seq, Dh), ACT_DTYPE),
                     jax.ShapeDtypeStruct((batch, num_heads, seq, seq), jnp.float32)]
    else:
        out_specs = out_spec_o
        out_shape = jax.ShapeDtypeStruct((batch, num_heads, seq, Dh), ACT_DTYPE)

    res = pl.pallas_call(
        _mha_kernel,
        grid=(batch, num_heads),
        in_specs=in_specs,
        out_specs=out_specs,
        out_shape=out_shape,
        compiler_params=pltpu.CompilerParams(
            dimension_semantics=("parallel", "parallel")),
    )(qkv_h, add_mask)

    if return_scores:
        o_heads, scores = res
    else:
        o_heads, scores = res, None
    # Merge heads back to (B*S, D) for the lane-dense Wo GEMM (JAX glue).
    out2d = o_heads.transpose(0, 2, 1, 3).reshape(batch * seq, D)
    return out2d, scores


# ----------------------------- Parameter init -----------------------------

def _dense(key, d_in, d_out):
    w = jax.random.normal(key, (d_in, d_out), jnp.float32) * 0.02
    b = jnp.zeros((1, d_out), jnp.float32)
    return w, b


def init_params(key, vocab_size, d_model, num_heads, d_ff, num_layers,
                num_segments, max_seq_len):
    head_dim = d_model // num_heads
    scale = 1.0 / math.sqrt(head_dim)
    keys = jax.random.split(key, 3 + num_layers)
    params = {
        "tok_emb": jax.random.normal(keys[0], (vocab_size, d_model), jnp.float32) * 0.02,
        "pos_emb": jax.random.normal(keys[1], (max_seq_len, d_model), jnp.float32) * 0.02,
        "seg_emb": jax.random.normal(keys[2], (num_segments, d_model), jnp.float32) * 0.02,
        "layers": [],
    }
    for i in range(num_layers):
        lk = jax.random.split(keys[3 + i], 6)
        wq, bq = _dense(lk[0], d_model, d_model)
        wk, bk = _dense(lk[1], d_model, d_model)
        wv, bv = _dense(lk[2], d_model, d_model)
        wo, bo = _dense(lk[3], d_model, d_model)
        w1, b1 = _dense(lk[4], d_model, d_ff)
        w2, b2 = _dense(lk[5], d_ff, d_model)
        # Fuse Q|K|V into one (D, 3D) projection; fold the 1/sqrt(head_dim)
        # attention scale into the Q weights/bias (equivalent to scaling the
        # scores, modulo one extra bf16 rounding).
        wqkv = jnp.concatenate([wq * scale, wk, wv], axis=1)
        bqkv = jnp.concatenate([bq * scale, bk, bv], axis=1)
        params["layers"].append({
            "wqkv": wqkv.astype(ACT_DTYPE), "bqkv": bqkv,
            "wo": wo.astype(ACT_DTYPE), "bo": bo,
            "ff1_w": w1.astype(ACT_DTYPE), "ff1_b": b1,
            "ff2_w": w2.astype(ACT_DTYPE), "ff2_b": b2,
            "ln1_g": jnp.ones((1, d_model), jnp.float32),
            "ln1_b": jnp.zeros((1, d_model), jnp.float32),
            "ln2_g": jnp.ones((1, d_model), jnp.float32),
            "ln2_b": jnp.zeros((1, d_model), jnp.float32),
        })
    return params


# ----------------------------- Forward pass -----------------------------

def bert_forward(params, x_ids, segment_label, mask, num_heads):
    B, S = x_ids.shape
    D = params["tok_emb"].shape[1]

    # BERTEmbedding: token + position + segment embeddings (gathers = glue).
    pos_ids = jnp.arange(S)
    h = (jnp.take(params["tok_emb"], x_ids, axis=0)
         + jnp.take(params["pos_emb"], pos_ids, axis=0)[None, :, :]
         + jnp.take(params["seg_emb"], segment_label, axis=0))          # (B, S, D)
    h = h.astype(ACT_DTYPE).reshape(B * S, D)

    # Additive attention mask (0 keep / -1e9 masked), precomputed once.
    add_mask = jnp.where(mask.reshape(B, 1, S) > 0, 0.0, -1e9).astype(jnp.float32)

    num_layers = len(params["layers"])
    attn_scores = None
    for li, lp in enumerate(params["layers"]):
        last = li == num_layers - 1

        # MultiHeadAttention: fused QKV projection + head-tiled attention.
        qkv = pallas_linear(h, lp["wqkv"], lp["bqkv"])                  # (B*S, 3D)
        attn2d, scores = pallas_attention(qkv, add_mask, B, S, num_heads,
                                          return_scores=last)
        if last:
            attn_scores = scores

        # Output projection fused with residual-add + LayerNorm 1.
        h1 = pallas_linear_add_norm(attn2d, lp["wo"], lp["bo"], h,
                                    lp["ln1_g"], lp["ln1_b"])

        # Position-wise FFN: Linear -> ReLU, then Linear fused with AddNorm 2.
        # TODO(synk): FF1+FF2+AddNorm could be fused into one kernel keeping
        #             the (tm, d_ff) activation in VMEM (saves an HBM round
        #             trip per layer).
        ff = pallas_linear(h1, lp["ff1_w"], lp["ff1_b"], activation="relu")
        h = pallas_linear_add_norm(ff, lp["ff2_w"], lp["ff2_b"], h1,
                                   lp["ln2_g"], lp["ln2_b"])
        # TODO(synk): nn.Dropout is identity here (eval-mode semantics).

    out = h.reshape(B, S, D).astype(jnp.float32)
    return out, attn_scores


# ----------------------------- Main -----------------------------

if __name__ == "__main__":
    vocab_size = 50
    d_model = 32
    num_heads = 4
    d_ff = 64
    num_layers = 2
    num_segments = 3
    max_seq_len = 16
    B, S = 2, 8

    key = jax.random.PRNGKey(0)
    pkey, ikey, skey = jax.random.split(key, 3)

    params = init_params(pkey, vocab_size, d_model, num_heads, d_ff,
                         num_layers, num_segments, max_seq_len)

    x_ids = jax.random.randint(ikey, (B, S), 0, vocab_size, dtype=jnp.int32)
    segment_label = jax.random.randint(skey, (B, S), 0, num_segments, dtype=jnp.int32)
    mask = jnp.ones((B, S), dtype=jnp.int32)  # 1 = attend, 0 = masked

    out, scores = bert_forward(params, x_ids, segment_label, mask, num_heads)
    out, scores = jax.block_until_ready((out, scores))

    assert out.shape == (B, S, d_model)
    assert scores.shape == (B, num_heads, S, S)
    assert bool(jnp.all(jnp.isfinite(out)))
    # Each attention-score row is a softmax distribution -> sums to ~1
    # (tolerance loosened for the EUP approximate reciprocal).
    assert bool(jnp.allclose(jnp.sum(scores, axis=-1), 1.0, atol=1e-2))

    print("KERNEL_OK")
</pallas_src>

<mosaic_0001>
module attributes {stable_mosaic.version = 11 : i64} {
  func.func @_linear_kernel(%arg0: i32, %arg1: i32, %arg2: i32, %arg3: memref<16x32xbf16, #tpu.memory_space<vmem>>, %arg4: memref<32x96xbf16, #tpu.memory_space<vmem>>, %arg5: memref<1x96xf32, #tpu.memory_space<vmem>>, %arg6: memref<16x96xbf16, #tpu.memory_space<vmem>>, %arg7: memref<16x96xf32, #tpu.memory_space<vmem>>) attributes {dimension_semantics = [#tpu.dimension_semantics<parallel>, #tpu.dimension_semantics<parallel>, #tpu.dimension_semantics<arbitrary>], iteration_bounds = array<i64: 1, 1, 1>, scalar_prefetch = 0 : i64, scratch_operands = 1 : i64, tpu.core_type = #tpu.core_type<tc>, window_params = [{transform_indices = @transform_0, window_bounds = array<i64: 16, 32>}, {transform_indices = @transform_1, window_bounds = array<i64: 32, 96>}, {transform_indices = @transform_2, window_bounds = array<i64: 1, 96>}, {transform_indices = @transform_3, window_bounds = array<i64: 16, 96>}]} {
    %c0_i32 = arith.constant 0 : i32
    %0 = arith.cmpi eq, %arg2, %c0_i32 : i32
    %1 = arith.extui %0 : i1 to i32
    %c0_i32_0 = arith.constant 0 : i32
    %2 = arith.cmpi ne, %1, %c0_i32_0 : i32
    scf.if %2 {
      %cst_10 = arith.constant 0.000000e+00 : f32
      %12 = vector.broadcast %cst_10 : f32 to vector<16x96xf32>
      %c0_11 = arith.constant 0 : index
      %c0_12 = arith.constant 0 : index
      %13 = vector.load %arg7[%c0_11, %c0_12] : memref<16x96xf32, #tpu.memory_space<vmem>>, vector<16x96xf32>
      tpu.vector_store %arg7[%c0_11, %c0_12], %12 {strides = array<i32>} : memref<16x96xf32, #tpu.memory_space<vmem>>, vector<16x96xf32>,
    } else {
    }
    %c0 = arith.constant 0 : index
    %c0_1 = arith.constant 0 : index
    %3 = vector.load %arg7[%c0, %c0_1] : memref<16x96xf32, #tpu.memory_space<vmem>>, vector<16x96xf32>
    %c0_2 = arith.constant 0 : index
    %c0_3 = arith.constant 0 : index
    %4 = vector.load %arg3[%c0_2, %c0_3] : memref<16x32xbf16, #tpu.memory_space<vmem>>, vector<16x32xbf16>
    %c0_4 = arith.constant 0 : index
    %c0_5 = arith.constant 0 : index
    %5 = vector.load %arg4[%c0_4, %c0_5] : memref<32x96xbf16, #tpu.memory_space<vmem>>, vector<32x96xbf16>
    %cst = arith.constant dense<0.000000e+00> : vector<16x96xf32>
    %6 = tpu.matmul %4, %5, %cst {dimension_numbers = #tpu.dot_dimension_numbers<[1], [0], [0], [1], [0, 0, 1, 1], [], []>} : vector<16x32xbf16>, vector<32x96xbf16>, vector<16x96xf32> -> vector<16x96xf32>
    %7 = arith.addf %3, %6 : vector<16x96xf32>
    %c0_6 = arith.constant 0 : index
    %c0_7 = arith.constant 0 : index
    %8 = vector.load %arg7[%c0_6, %c0_7] : memref<16x96xf32, #tpu.memory_space<vmem>>, vector<16x96xf32>
    tpu.vector_store %arg7[%c0_6, %c0_7], %7 {strides = array<i32>} : memref<16x96xf32, #tpu.memory_space<vmem>>, vector<16x96xf32>,
    %c0_i32_8 = arith.constant 0 : i32
    %9 = arith.cmpi eq, %arg2, %c0_i32_8 : i32
    %10 = arith.extui %9 : i1 to i32
    %c0_i32_9 = arith.constant 0 : i32
    %11 = arith.cmpi ne, %10, %c0_i32_9 : i32
    scf.if %11 {
      %c0_10 = arith.constant 0 : index
      %c0_11 = arith.constant 0 : index
      %12 = vector.load %arg7[%c0_10, %c0_11] : memref<16x96xf32, #tpu.memory_space<vmem>>, vector<16x96xf32>
      %c0_12 = arith.constant 0 : index
      %c0_13 = arith.constant 0 : index
      %13 = vector.load %arg5[%c0_12, %c0_13] : memref<1x96xf32, #tpu.memory_space<vmem>>, vector<1x96xf32>
      %14 = vector.broadcast %13 : vector<1x96xf32> to vector<16x96xf32>
      %15 = arith.addf %12, %14 : vector<16x96xf32>
      %16 = arith.truncf %15 : vector<16x96xf32> to vector<16x96xbf16>
      %c0_14 = arith.constant 0 : index
      %c0_15 = arith.constant 0 : index
      %17 = vector.load %arg6[%c0_14, %c0_15] : memref<16x96xbf16, #tpu.memory_space<vmem>>, vector<16x96xbf16>
      tpu.vector_store %arg6[%c0_14, %c0_15], %16 {strides = array<i32>} : memref<16x96xbf16, #tpu.memory_space<vmem>>, vector<16x96xbf16>,
    } else {
    }
    return
  }
  func.func @transform_0(%arg0: i32, %arg1: i32, %arg2: i32) -> (i32, i32) {
    %c0_i32 = arith.constant 0 : i32
    return %arg0, %arg2 : i32, i32
  }
  func.func @transform_1(%arg0: i32, %arg1: i32, %arg2: i32) -> (i32, i32) {
    %c0_i32 = arith.constant 0 : i32
    return %arg2, %arg1 : i32, i32
  }
  func.func @transform_2(%arg0: i32, %arg1: i32, %arg2: i32) -> (i32, i32) {
    %c0_i32 = arith.constant 0 : i32
    %c0_i32_0 = arith.constant 0 : i32
    return %c0_i32, %arg1 : i32, i32
  }
  func.func @transform_3(%arg0: i32, %arg1: i32, %arg2: i32) -> (i32, i32) {
    %c0_i32 = arith.constant 0 : i32
    return %arg0, %arg1 : i32, i32
  }
}

</mosaic_0001>

<llo_original>
// kernel: tpu_custom_call.1
$region0: #{tpu_custom_call.1}
  #allocation0 [shape = 'u32[]', space=smem, size = 0x4, offset = 0x4, fixed_abs, tag = 'smem constant byte address 0x4 - core index']
  #allocation1 [shape = 'u32[144,128]{1,0:T(1,128)}', space=vmem, size = 0x12000, scoped, tag = 'internal scratch']
  #allocation2 [shape = 'f32[16,96]{1,0:T(8,128)}', space=vmem, size = 0x2000, scoped, tag = 'scratch operand']
  %s0 = inlined_call_operand.hbm [shape: bf16[16,32], index: 0, kind: input, shape index: {}]
  %s1 = inlined_call_operand.hbm [shape: bf16[32,96], index: 1, kind: input, shape index: {}]
  %s2 = inlined_call_operand.vmem [shape: f32[1,96], index: 2, kind: input, shape index: {}]
  %s3 = inlined_call_operand.hbm [shape: bf16[16,96], index: 3, kind: output, shape index: {}]
  %s4 = sld [smem:[#allocation0]]
  $region38: #{tpu_custom_call.1} parent=0
    _
  %s6 = ssub.s32 1, %s4
  %s7 = scalar_select 0, %s6, %s4
  $region1: #{tpu_custom_call.1} parent=0
    #allocation3 [shape = 'u8[4096]{0}', space=vmem, size = 0x1000, scoped, tag = 'input window, operand 0, single buffered']
    #allocation4 [shape = 's32[1]{0}', space=sflag, size = 0x4, scoped, tag = 'scoped memory for tpu_custom_call.1']
    #allocation5 [shape = 's32[1]{0}', space=sflag, size = 0x4, scoped, tag = 'scoped memory for tpu_custom_call.1']
    #allocation6 [shape = 'u8[8192]{0}', space=vmem, size = 0x2000, scoped, tag = 'input window, operand 1, single buffered']
    #allocation7 [shape = 's32[1]{0}', space=sflag, size = 0x4, scoped, tag = 'scoped memory for tpu_custom_call.1']
    #allocation8 [shape = 'u8[4096]{0}', space=vmem, size = 0x1000, scoped, tag = 'output window, operand 0, single buffered']
    %8 = vsyncpa [#allocation4], 0
    %9 = vsyncpa [#allocation7], 0
    %10 = vsyncpa [#allocation5], 0
    // Predicated region
    $region2: #{tpu_custom_call.1} parent=1 // pred_check
      _
    $region3: #{tpu_custom_call.1} parent=1 // pred_check_branch
      %12 = sbr.rel (0) target = $region5
    $region4: #{tpu_custom_call.1} parent=1 // pred_region
      %s14 = ssub.s32 128, 128
      %15 = vsyncadd [#allocation4], %s14
      %s16 = sshll.u32 [#allocation3], 4
      %s17 = int_to_ptr.vmem [resolvable:$true] %s16
      %22 = dma.hbm_to_vmem [thread:$0]  %s0, 128, %s17, [#allocation4], 64, 64, 4
    $region5: #{tpu_custom_call.1} parent=1 // pred_fallthru
      _
    // Predicated region
    $region6: #{tpu_custom_call.1} parent=1 // pred_check
      _
    $region7: #{tpu_custom_call.1} parent=1 // pred_check_branch
      %24 = sbr.rel (0) target = $region9
    $region8: #{tpu_custom_call.1} parent=1 // pred_region
      %s26 = ssub.s32 256, 256
      %27 = vsyncadd [#allocation7], %s26
      %s28 = sshll.u32 [#allocation6], 4
      %s29 = int_to_ptr.vmem [resolvable:$true] %s28
      %34 = dma.hbm_to_vmem [thread:$0]  %s1, 256, %s29, [#allocation7], 64, 64, 4
    $region9: #{tpu_custom_call.1} parent=1 // pred_fallthru
      _
    // Predicated region
    $region10: #{tpu_custom_call.1} parent=1 // pred_check
      _
    $region11: #{tpu_custom_call.1} parent=1 // pred_check_branch
      %36 = sbr.rel (0) target = $region13
    $region12: #{tpu_custom_call.1} parent=1 // pred_region
      _
    $region13: #{tpu_custom_call.1} parent=1 // pred_fallthru
      _
    // Predicated region
    $region14: #{tpu_custom_call.1} parent=1 // pred_check
      _
    $region15: #{tpu_custom_call.1} parent=1 // pred_check_branch
      %38 = sbr.rel (0) target = $region17
    $region16: #{tpu_custom_call.1} parent=1 // pred_region
      %39 = dma.done [#allocation4], 128
    $region17: #{tpu_custom_call.1} parent=1 // pred_fallthru
      _
    // Predicated region
    $region18: #{tpu_custom_call.1} parent=1 // pred_check
      _
    $region19: #{tpu_custom_call.1} parent=1 // pred_check_branch
      %41 = sbr.rel (0) target = $region21
    $region20: #{tpu_custom_call.1} parent=1 // pred_region
      %42 = dma.done [#allocation7], 256
    $region21: #{tpu_custom_call.1} parent=1 // pred_fallthru
      _
    %p44 = scmp.eq.s32.totalorder 0, 0
    // Predicated region
    $region22: #{tpu_custom_call.1} parent=1 // pred_check
      %p45 = pneg %p44
    $region23: #{tpu_custom_call.1} parent=1 // pred_check_branch
      %47 = sbr.rel (%p45) target = $region25
    $region24: #{tpu_custom_call.1} parent=1 // pred_region
      %vm48 = vcmask 785408
      %49 = vst.msk [vmem:[#allocation2] sm:$0xff] %vm48, 0.0
      %50 = vst.msk [vmem:[#allocation2 + $0x8] sm:$0xff] %vm48, 0.0
    $region25: #{tpu_custom_call.1} parent=1 // pred_fallthru
      _
    %v51 = vld [vmem:[#allocation2] sm:$0xff]
    %v52 = vld [vmem:[#allocation2 + $0x8] sm:$0xff]
    %v53 = vld [vmem:[#allocation3] sm:$0xf]
    %v54 = vld [vmem:[#allocation3 + $0x4] sm:$0xf]
    %v55 = vld [vmem:[#allocation6] sm:$0xf]
    %v56 = vld [vmem:[#allocation6 + $0x4] sm:$0xf]
    %v57 = vld [vmem:[#allocation6 + $0x8] sm:$0xf]
    %v58 = vld [vmem:[#allocation6 + $0xc] sm:$0xf]
    %v61 = vunpack.c.l.b16 %v53
    %v62 = vunpack.c.l.b16 %v54
    %v63 = vpack.c.b16 %v62, %v61
    %v68 = vunpack.c.l.b16 %v55
    %v69 = vunpack.c.l.b16 %v56
    %v70 = vunpack.c.l.b16 %v57
    %v71 = vunpack.c.l.b16 %v58
    %v72 = vpack.c.b16 %v69, %v68
    %v73 = vpack.c.b16 %v71, %v70
    %vm76 = vcmask 261120
    %v78 = vsel %vm76, %v63, 0
    %80 = vmatprep.subr.bf16.mxu0 0
    %81 = vmatpush1.bf16.msra.mxu0 %v72
    %82 = vmatprep.subr.bf16.mxu0 0
    %83 = vmatpush1.bf16.msra.mxu0 %v73
    %84 = vmatprep.subr.bf16.mxu0 0
    %85 = vmatpush1.bf16.msra.mxu0 0
    %86 = vmatprep.subr.bf16.mxu0 0
    %87 = vmatpush1.bf16.msra.mxu0 0
    %88 = vmatprep.subr.bf16.mxu0 0
    %89 = vmatpush1.bf16.msra.mxu0 0
    %90 = vmatprep.subr.bf16.mxu0 0
    %91 = vmatpush1.bf16.msra.mxu0 0
    %92 = vmatprep.subr.bf16.mxu0 0
    %93 = vmatpush1.bf16.msra.mxu0 0
    %94 = vmatprep.subr.bf16.mxu0 0
    %95 = vmatpush1.bf16.msra.mxu0 0
    %96 = vmatprep.subr.bf16.mxu0 0
    %97 = vmatpush1.bf16.msra.mxu0 0
    %98 = vmatprep.subr.bf16.mxu0 0
    %99 = vmatpush1.bf16.msra.mxu0 0
    %100 = vmatprep.subr.bf16.mxu0 0
    %101 = vmatpush1.bf16.msra.mxu0 0
    %102 = vmatprep.subr.bf16.mxu0 0
    %103 = vmatpush1.bf16.msra.mxu0 0
    %104 = vmatprep.subr.bf16.mxu0 0
    %105 = vmatpush1.bf16.msra.mxu0 0
    %106 = vmatprep.subr.bf16.mxu0 0
    %107 = vmatpush1.bf16.msra.mxu0 0
    %108 = vmatprep.subr.bf16.mxu0 0
    %109 = vmatpush1.bf16.msra.mxu0 0
    %110 = vmatprep.subr.bf16.mxu0 0
    %111 = vmatpush1.bf16.msra.mxu0 0
    %112 = vmatprep.mubr.bf16.mxu0 0
    %113 = vmatmul.mubr.bf16.gmra.mrb[0].mxu0 %v78
    %v114 = vpop.f32.mrb[0].mxu0
    %v115 = vadd.f32 0.0, %v114
    %v116 = vpop.f32.mrb[0].mxu0
    %v117 = vpop.f32.mrb[0].mxu0
    %v118 = vadd.f32 0.0, %v117
    %v119 = vpop.f32.mrb[0].mxu0
    %120 = vdwg.mxu0
    %v121 = vadd.f32 %v51, %v115
    %v122 = vadd.f32 %v52, %v118
    %vm123 = vcmask 785408
    %124 = vst.msk [vmem:[#allocation2] sm:$0xff] %vm123, %v121
    %125 = vst.msk [vmem:[#allocation2 + $0x8] sm:$0xff] %vm123, %v122
    // Predicated region
    $region26: #{tpu_custom_call.1} parent=1 // pred_check
      %p126 = pneg %p44
    $region27: #{tpu_custom_call.1} parent=1 // pred_check_branch
      %128 = sbr.rel (%p126) target = $region29
    $region28: #{tpu_custom_call.1} parent=1 // pred_region
      %v129 = vld [vmem:[#allocation2] sm:$0xff]
      %v130 = vld [vmem:[#allocation2 + $0x8] sm:$0xff]
      %v131 = vld [vmem:[%s2] sm:$0x1]
      %v133 = vlaneseq
      %v134 = vshrl.u32 %v133, 7
      %v135 = vsub.s32 0, %v134
      %v136 = vrot.slane %v131, %v135
      %v138 = vadd.f32 %v129, %v136
      %v139 = vadd.f32 %v130, %v136
      %v140 = vpack.c.bf16 %v139, %v138
      %v142 = vunpack.c.l.b16 %v140
      %v143 = vunpack.c.h.b16 %v140
      %v144 = vpack.c.b16 %v142, %v142
      %v145 = vpack.c.b16 %v143, %v143
      %vm148 = vcmask 781312
      %149 = vst.msk [vmem:[#allocation8] sm:$0xf] %vm148, %v144
      %150 = vst.msk [vmem:[#allocation8 + $0x4] sm:$0xf] %vm148, %v145
    $region29: #{tpu_custom_call.1} parent=1 // pred_fallthru
      _
    // Predicated region
    $region30: #{tpu_custom_call.1} parent=1 // pred_check
      _
    $region31: #{tpu_custom_call.1} parent=1 // pred_check_branch
      %152 = sbr.rel (0) target = $region33
    $region32: #{tpu_custom_call.1} parent=1 // pred_region
      %s154 = ssub.s32 128, 128
      %155 = vsyncadd [#allocation5], %s154
      %s156 = sshll.u32 [#allocation8], 4
      %s157 = int_to_ptr.vmem [resolvable:$true] %s156
      %162 = dma.vmem_to_hbm [thread:$0]  %s157, 128, %s3, [#allocation5], 64, 64, 4
    $region33: #{tpu_custom_call.1} parent=1 // pred_fallthru
      _
    // Predicated region
    $region34: #{tpu_custom_call.1} parent=1 // pred_check
      _
    $region35: #{tpu_custom_call.1} parent=1 // pred_check_branch
      %164 = sbr.rel (0) target = $region37
    $region36: #{tpu_custom_call.1} parent=1 // pred_region
      %165 = dma.done [#allocation5], 128
    $region37: #{tpu_custom_call.1} parent=1 // pred_fallthru
      _
    %166 = vsyncpa [#allocation4], 1
    %167 = vsyncpa [#allocation7], 1
    %168 = vsyncpa [#allocation5], 1

</llo_original>
